<compile_context>
chip_gen: v7x
topology: tpu7x:2x2x1
jax: 0.10.0
libtpu: 0.0.40
codegen_flags: <defaults>
</compile_context>

<pallas_src>
from functools import partial

import jax
import jax.numpy as jnp
from jax.experimental import pallas as pl
from jax.experimental.pallas import tpu as pltpu

P = 16          # padded hidden width (>= max layer width, keeps slabs one vreg-tile wide)
TB_MAX = 8192   # max batch-rows per tile; ~24 MiB live VMEM worst case (lane-padded tiles)


def mlp_kernel(x_ref, w_ref, b_ref, o_ref, *, n_in):
    """x_ref: (tb, n_in) native-layout activations (batch on sublanes);
    w_ref: (3, P, P) zero-padded transposed weights (slab[l] = W_l.T padded);
    b_ref: (3, 1, P) zero-padded biases; o_ref: (tb, 1) output column."""
    x = x_ref[...]                                                       # (tb, n_in)

    # layer 1: (tb, n_in) @ (n_in, P) -> (tb, P), explicit broadcast bias add + ReLU
    h = jnp.dot(x, w_ref[0, 0:n_in, :], preferred_element_type=jnp.float32)
    h = jnp.maximum(h + b_ref[0], 0.0)

    # layer 2: (tb, P) @ (P, P) -> (tb, P); padded rows/cols are zero so math is exact
    h = jnp.dot(h, w_ref[1], preferred_element_type=jnp.float32)
    h = jnp.maximum(h + b_ref[1], 0.0)

    # layer 3: only output column 0 is live -> compute just that column, (tb, 1)
    y = jnp.dot(h, w_ref[2, :, 0:1], preferred_element_type=jnp.float32)
    o_ref[...] = y + b_ref[2, :, 0:1]


def pack_params(params, p=P):
    """Pack (W1,b1,W2,b2,W3,b3) [PyTorch layout: W (out,in), b (out,)] into a zero-padded
    transposed weight slab (3, p, p) with slab[l, :in, :out] = W_l.T, and a bias slab
    (3, 1, p).  One-time cost outside the hot path; 2 tiny resident operands at runtime."""
    w_slab = jnp.zeros((3, p, p), jnp.float32)
    b_slab = jnp.zeros((3, 1, p), jnp.float32)
    for l, (w, b) in enumerate(zip(params[0::2], params[1::2])):
        o, i = w.shape
        w_slab = w_slab.at[l, :i, :o].set(w.T)
        b_slab = b_slab.at[l, 0, :o].set(b)
    return w_slab, b_slab


def _round_up(n, m):
    return ((n + m - 1) // m) * m


def _pick_tile(bp):
    """Rows per grid step: whole batch when small; otherwise aim for >= 8 grid steps
    (pipeline depth + both v7x TensorCores busy) capped at TB_MAX rows for VMEM."""
    if bp <= 2 * 128:
        return bp
    tb = _round_up(pl.cdiv(bp, 8), 128)
    return int(min(tb, TB_MAX))


def mynet_forward(x, w_slab, b_slab):
    """Pallas forward of MyNet.  x: (B, 10) f32 (native layout), packed slabs -> (B, 1)."""
    B, f_in = x.shape
    p = w_slab.shape[-1]
    x = x.astype(jnp.float32)

    bp = _round_up(B, 8)                       # sublane multiple
    tb = _pick_tile(bp)
    bp = _round_up(bp, tb)
    grid = (bp // tb,)

    if bp != B:                                # pad rows only when strictly needed
        x = jnp.pad(x, ((0, bp - B), (0, 0)))

    y = pl.pallas_call(
        partial(mlp_kernel, n_in=f_in),
        out_shape=jax.ShapeDtypeStruct((bp, 1), jnp.float32),
        grid=grid,
        in_specs=[
            pl.BlockSpec((tb, f_in), lambda i: (i, 0)),      # x tile, pipelined over batch
            pl.BlockSpec((3, p, p), lambda i: (0, 0, 0)),    # weight slab, VMEM-resident
            pl.BlockSpec((3, 1, p), lambda i: (0, 0, 0)),    # bias slab, VMEM-resident
        ],
        out_specs=pl.BlockSpec((tb, 1), lambda i: (i, 0)),   # tiny masked store, acceptable
        compiler_params=pltpu.CompilerParams(
            dimension_semantics=("parallel",),               # split grid across v7x TCs
            vmem_limit_bytes=32 * 1024 * 1024,
        ),
    )(x, w_slab, b_slab)

    return y[:B, :]                                          # (B, 1)


def init_params(key):
    """Deterministic PyTorch-Linear-style init; W in PyTorch layout (out_features, in_features)."""
    def linear(k, fan_in, fan_out):
        kw, kb = jax.random.split(k)
        bound = 1.0 / jnp.sqrt(fan_in)
        w = jax.random.uniform(kw, (fan_out, fan_in), jnp.float32, -bound, bound)
        b = jax.random.uniform(kb, (fan_out,), jnp.float32, -bound, bound)
        return w, b

    k1, k2, k3 = jax.random.split(key, 3)
    w1, b1 = linear(k1, 10, 5)
    w2, b2 = linear(k2, 5, 3)
    w3, b3 = linear(k3, 3, 1)
    return w1, b1, w2, b2, w3, b3


def reference_forward(x, params):
    w1, b1, w2, b2, w3, b3 = params
    h1 = jax.nn.relu(x @ w1.T + b1)
    h2 = jax.nn.relu(h1 @ w2.T + b2)
    return h2 @ w3.T + b3


if __name__ == "__main__":
    key = jax.random.PRNGKey(0)
    kx, kp = jax.random.split(key)

    B = 8                                      # small batch for the check
    x = jax.random.normal(kx, (B, 10), jnp.float32)
    params = init_params(kp)
    w_slab, b_slab = pack_params(params)       # one-time packing, outside the hot path

    out = jax.block_until_ready(mynet_forward(x, w_slab, b_slab))
    ref = reference_forward(x, params)

    assert out.shape == (B, 1), out.shape
    assert jnp.allclose(out, ref, atol=1e-5, rtol=1e-5), "mismatch vs reference"
    print("KERNEL_OK")
</pallas_src>

<mosaic_0001>
module attributes {stable_mosaic.version = 11 : i64} {
  func.func @mlp_kernel(%arg0: i32, %arg1: memref<8x10xf32, #tpu.memory_space<vmem>>, %arg2: memref<3x16x16xf32, #tpu.memory_space<vmem>>, %arg3: memref<3x1x16xf32, #tpu.memory_space<vmem>>, %arg4: memref<8x1xf32, #tpu.memory_space<vmem>>) attributes {dimension_semantics = [#tpu.dimension_semantics<parallel>], iteration_bounds = array<i64: 1>, scalar_prefetch = 0 : i64, scratch_operands = 0 : i64, tpu.core_type = #tpu.core_type<tc>, window_params = [{transform_indices = @transform_0, window_bounds = array<i64: 8, 10>}, {pipeline_mode = #tpu.pipeline_mode<synchronous>, transform_indices = @transform_1, window_bounds = array<i64: 3, 16, 16>}, {pipeline_mode = #tpu.pipeline_mode<synchronous>, transform_indices = @transform_2, window_bounds = array<i64: 3, 1, 16>}, {transform_indices = @transform_3, window_bounds = array<i64: 8, 1>}]} {
    %c0 = arith.constant 0 : index
    %c0_0 = arith.constant 0 : index
    %0 = vector.load %arg1[%c0, %c0_0] : memref<8x10xf32, #tpu.memory_space<vmem>>, vector<8x10xf32>
    %c0_1 = arith.constant 0 : index
    %c0_2 = arith.constant 0 : index
    %c0_3 = arith.constant 0 : index
    %1 = vector.load %arg2[%c0_1, %c0_2, %c0_3] : memref<3x16x16xf32, #tpu.memory_space<vmem>>, vector<1x10x16xf32>
    %2 = vector.shape_cast %1 : vector<1x10x16xf32> to vector<10x16xf32>
    %cst = arith.constant dense<0.000000e+00> : vector<8x16xf32>
    %3 = tpu.matmul %0, %2, %cst {dimension_numbers = #tpu.dot_dimension_numbers<[1], [0], [0], [1], [0, 0, 1, 1], [], []>} : vector<8x10xf32>, vector<10x16xf32>, vector<8x16xf32> -> vector<8x16xf32>
    %c0_4 = arith.constant 0 : index
    %c0_5 = arith.constant 0 : index
    %c0_6 = arith.constant 0 : index
    %4 = vector.load %arg3[%c0_4, %c0_5, %c0_6] : memref<3x1x16xf32, #tpu.memory_space<vmem>>, vector<1x1x16xf32>
    %5 = vector.shape_cast %4 : vector<1x1x16xf32> to vector<1x16xf32>
    %6 = vector.broadcast %5 : vector<1x16xf32> to vector<8x16xf32>
    %7 = arith.addf %3, %6 : vector<8x16xf32>
    %cst_7 = arith.constant 0.000000e+00 : f32
    %8 = vector.broadcast %cst_7 : f32 to vector<8x16xf32>
    %9 = arith.maximumf %7, %8 : vector<8x16xf32>
    %c1 = arith.constant 1 : index
    %c0_8 = arith.constant 0 : index
    %c0_9 = arith.constant 0 : index
    %10 = vector.load %arg2[%c1, %c0_8, %c0_9] : memref<3x16x16xf32, #tpu.memory_space<vmem>>, vector<1x16x16xf32>
    %11 = vector.shape_cast %10 : vector<1x16x16xf32> to vector<16x16xf32>
    %cst_10 = arith.constant dense<0.000000e+00> : vector<8x16xf32>
    %12 = tpu.matmul %9, %11, %cst_10 {dimension_numbers = #tpu.dot_dimension_numbers<[1], [0], [0], [1], [0, 0, 1, 1], [], []>} : vector<8x16xf32>, vector<16x16xf32>, vector<8x16xf32> -> vector<8x16xf32>
    %c1_11 = arith.constant 1 : index
    %c0_12 = arith.constant 0 : index
    %c0_13 = arith.constant 0 : index
    %13 = vector.load %arg3[%c1_11, %c0_12, %c0_13] : memref<3x1x16xf32, #tpu.memory_space<vmem>>, vector<1x1x16xf32>
    %14 = vector.shape_cast %13 : vector<1x1x16xf32> to vector<1x16xf32>
    %15 = vector.broadcast %14 : vector<1x16xf32> to vector<8x16xf32>
    %16 = arith.addf %12, %15 : vector<8x16xf32>
    %cst_14 = arith.constant 0.000000e+00 : f32
    %17 = vector.broadcast %cst_14 : f32 to vector<8x16xf32>
    %18 = arith.maximumf %16, %17 : vector<8x16xf32>
    %c2 = arith.constant 2 : index
    %c0_15 = arith.constant 0 : index
    %c0_16 = arith.constant 0 : index
    %19 = vector.load %arg2[%c2, %c0_15, %c0_16] : memref<3x16x16xf32, #tpu.memory_space<vmem>>, vector<1x16x1xf32>
    %20 = vector.shape_cast %19 : vector<1x16x1xf32> to vector<16x1xf32>
    %cst_17 = arith.constant dense<0.000000e+00> : vector<8x1xf32>
    %21 = tpu.matmul %18, %20, %cst_17 {dimension_numbers = #tpu.dot_dimension_numbers<[1], [0], [0], [1], [0, 0, 1, 1], [], []>} : vector<8x16xf32>, vector<16x1xf32>, vector<8x1xf32> -> vector<8x1xf32>
    %c2_18 = arith.constant 2 : index
    %c0_19 = arith.constant 0 : index
    %c0_20 = arith.constant 0 : index
    %22 = vector.load %arg3[%c2_18, %c0_19, %c0_20] : memref<3x1x16xf32, #tpu.memory_space<vmem>>, vector<1x1x1xf32>
    %23 = vector.shape_cast %22 : vector<1x1x1xf32> to vector<1x1xf32>
    %24 = vector.broadcast %23 : vector<1x1xf32> to vector<8x1xf32>
    %25 = arith.addf %21, %24 : vector<8x1xf32>
    %c0_21 = arith.constant 0 : index
    %c0_22 = arith.constant 0 : index
    %26 = vector.load %arg4[%c0_21, %c0_22] : memref<8x1xf32, #tpu.memory_space<vmem>>, vector<8x1xf32>
    tpu.vector_store %arg4[%c0_21, %c0_22], %25 {strides = array<i32>} : memref<8x1xf32, #tpu.memory_space<vmem>>, vector<8x1xf32>,
    return
  }
  func.func @transform_0(%arg0: i32) -> (i32, i32) {
    %c0_i32 = arith.constant 0 : i32
    %c0_i32_0 = arith.constant 0 : i32
    return %arg0, %c0_i32 : i32, i32
  }
  func.func @transform_1(%arg0: i32) -> (i32, i32, i32) {
    %c0_i32 = arith.constant 0 : i32
    %c0_i32_0 = arith.constant 0 : i32
    %c0_i32_1 = arith.constant 0 : i32
    %c0_i32_2 = arith.constant 0 : i32
    return %c0_i32, %c0_i32_0, %c0_i32_1 : i32, i32, i32
  }
  func.func @transform_2(%arg0: i32) -> (i32, i32, i32) {
    %c0_i32 = arith.constant 0 : i32
    %c0_i32_0 = arith.constant 0 : i32
    %c0_i32_1 = arith.constant 0 : i32
    %c0_i32_2 = arith.constant 0 : i32
    return %c0_i32, %c0_i32_0, %c0_i32_1 : i32, i32, i32
  }
  func.func @transform_3(%arg0: i32) -> (i32, i32) {
    %c0_i32 = arith.constant 0 : i32
    %c0_i32_0 = arith.constant 0 : i32
    return %arg0, %c0_i32 : i32, i32
  }
}

</mosaic_0001>

<llo_original>
// kernel: tpu_custom_call.1
$region0: #{tpu_custom_call.1}
  #allocation0 [shape = 'u32[]', space=smem, size = 0x4, offset = 0x4, fixed_abs, tag = 'smem constant byte address 0x4 - core index']
  #allocation1 [shape = 'u32[144,128]{1,0:T(1,128)}', space=vmem, size = 0x12000, scoped, tag = 'internal scratch']
  %s0 = inlined_call_operand.hbm [shape: f32[8,10], index: 0, kind: input, shape index: {}]
  %s1 = inlined_call_operand.hbm [shape: f32[3,16,16], index: 1, kind: input, shape index: {}]
  %s2 = inlined_call_operand.vmem [shape: f32[3,1,16], index: 2, kind: input, shape index: {}]
  %s3 = inlined_call_operand.vmem [shape: f32[8,1], index: 3, kind: output, shape index: {}]
  %s4 = sld [smem:[#allocation0]]
  $region30: #{tpu_custom_call.1} parent=0
    _
  %s6 = ssub.s32 1, %s4
  %s7 = scalar_select 0, %s6, %s4
  $region1: #{tpu_custom_call.1} parent=0
    #allocation2 [shape = 'u8[4096]{0}', space=vmem, size = 0x1000, scoped, tag = 'input window, operand 0, single buffered']
    #allocation3 [shape = 's32[1]{0}', space=sflag, size = 0x4, scoped, tag = 'scoped memory for tpu_custom_call.1']
    #allocation4 [shape = 'u8[24576]{0}', space=vmem, size = 0x6000, scoped, tag = 'input window, operand 1, single buffered']
    #allocation5 [shape = 's32[1]{0}', space=sflag, size = 0x4, scoped, tag = 'scoped memory for tpu_custom_call.1']
    %8 = vsyncpa [#allocation3], 0
    %9 = vsyncpa [#allocation5], 0
    // Predicated region
    $region2: #{tpu_custom_call.1} parent=1 // pred_check
      _
    $region3: #{tpu_custom_call.1} parent=1 // pred_check_branch
      %11 = sbr.rel (0) target = $region5
    $region4: #{tpu_custom_call.1} parent=1 // pred_region
      %s13 = ssub.s32 128, 128
      %14 = vsyncadd [#allocation3], %s13
      %s16 = sshll.u32 [#allocation2], 4
      %s17 = int_to_ptr.vmem [resolvable:$true] %s16
      %19 = dma.hbm_to_vmem [thread:$0]  %s0, 128, %s17, [#allocation3]
    $region5: #{tpu_custom_call.1} parent=1 // pred_fallthru
      _
    // Predicated region
    $region6: #{tpu_custom_call.1} parent=1 // pred_check
      _
    $region7: #{tpu_custom_call.1} parent=1 // pred_check_branch
      %21 = sbr.rel (0) target = $region9
    $region8: #{tpu_custom_call.1} parent=1 // pred_region
      %s23 = ssub.s32 768, 768
      %24 = vsyncadd [#allocation5], %s23
      %s25 = sshll.u32 [#allocation4], 4
      %s26 = int_to_ptr.vmem [resolvable:$true] %s25
      %31 = dma.hbm_to_vmem [thread:$0]  %s1, 768, %s26, [#allocation5], 128, 128, 8
    $region9: #{tpu_custom_call.1} parent=1 // pred_fallthru
      _
    // Predicated region
    $region10: #{tpu_custom_call.1} parent=1 // pred_check
      _
    $region11: #{tpu_custom_call.1} parent=1 // pred_check_branch
      %33 = sbr.rel (0) target = $region13
    $region12: #{tpu_custom_call.1} parent=1 // pred_region
      _
    $region13: #{tpu_custom_call.1} parent=1 // pred_fallthru
      _
    // Predicated region
    $region14: #{tpu_custom_call.1} parent=1 // pred_check
      _
    $region15: #{tpu_custom_call.1} parent=1 // pred_check_branch
      %35 = sbr.rel (0) target = $region17
    $region16: #{tpu_custom_call.1} parent=1 // pred_region
      %36 = dma.done [#allocation3], 128
    $region17: #{tpu_custom_call.1} parent=1 // pred_fallthru
      _
    // Predicated region
    $region18: #{tpu_custom_call.1} parent=1 // pred_check
      _
    $region19: #{tpu_custom_call.1} parent=1 // pred_check_branch
      %38 = sbr.rel (0) target = $region21
    $region20: #{tpu_custom_call.1} parent=1 // pred_region
      %39 = dma.done [#allocation5], 768
    $region21: #{tpu_custom_call.1} parent=1 // pred_fallthru
      _
    %v40 = vld [vmem:[#allocation2] sm:$0xff]
    %v41 = vld [vmem:[#allocation4] sm:$0xff]
    %v42 = vld [vmem:[#allocation4 + $0x8] sm:$0x3]
    %v43 = vld [vmem:[%s2] sm:$0x1]
    %v45 = vlaneseq
    %v46 = vshrl.u32 %v45, 7
    %v47 = vsub.s32 0, %v46
    %v48 = vrot.slane %v43, %v47
    %vm50 = vcmask 80896
    %v52 = vsel %vm50, %v40, 0
    %vm54 = vcmask 1041408
    %v56 = vsel %vm54, %v42, 0
    %58 = vmatprep.subr.mxu0 0.0
    %59 = vmatpush1.msra.mxu0 %v41
    %60 = vmatprep.subr.mxu0 0.0
    %61 = vmatpush1.msra.mxu0 %v56
    %62 = vmatprep.subr.mxu0 0.0
    %63 = vmatpush1.msra.mxu0 0.0
    %64 = vmatprep.subr.mxu0 0.0
    %65 = vmatpush1.msra.mxu0 0.0
    %66 = vmatprep.subr.mxu0 0.0
    %67 = vmatpush1.msra.mxu0 0.0
    %68 = vmatprep.subr.mxu0 0.0
    %69 = vmatpush1.msra.mxu0 0.0
    %70 = vmatprep.subr.mxu0 0.0
    %71 = vmatpush1.msra.mxu0 0.0
    %72 = vmatprep.subr.mxu0 0.0
    %73 = vmatpush1.msra.mxu0 0.0
    %74 = vmatprep.subr.mxu0 0.0
    %75 = vmatpush1.msra.mxu0 0.0
    %76 = vmatprep.subr.mxu0 0.0
    %77 = vmatpush1.msra.mxu0 0.0
    %78 = vmatprep.subr.mxu0 0.0
    %79 = vmatpush1.msra.mxu0 0.0
    %80 = vmatprep.subr.mxu0 0.0
    %81 = vmatpush1.msra.mxu0 0.0
    %82 = vmatprep.subr.mxu0 0.0
    %83 = vmatpush1.msra.mxu0 0.0
    %84 = vmatprep.subr.mxu0 0.0
    %85 = vmatpush1.msra.mxu0 0.0
    %86 = vmatprep.subr.mxu0 0.0
    %87 = vmatpush1.msra.mxu0 0.0
    %88 = vmatprep.subr.mxu0 0.0
    %89 = vmatpush1.msra.mxu0 0.0
    %90 = vmatprep.subr.mxu0 0.0
    %91 = vmatpush1.msra.mxu0 0.0
    %92 = vmatprep.subr.mxu0 0.0
    %93 = vmatpush1.msra.mxu0 0.0
    %94 = vmatprep.subr.mxu0 0.0
    %95 = vmatpush1.msra.mxu0 0.0
    %96 = vmatprep.subr.mxu0 0.0
    %97 = vmatpush1.msra.mxu0 0.0
    %98 = vmatprep.subr.mxu0 0.0
    %99 = vmatpush1.msra.mxu0 0.0
    %100 = vmatprep.subr.mxu0 0.0
    %101 = vmatpush1.msra.mxu0 0.0
    %102 = vmatprep.subr.mxu0 0.0
    %103 = vmatpush1.msra.mxu0 0.0
    %104 = vmatprep.subr.mxu0 0.0
    %105 = vmatpush1.msra.mxu0 0.0
    %106 = vmatprep.subr.mxu0 0.0
    %107 = vmatpush1.msra.mxu0 0.0
    %108 = vmatprep.subr.mxu0 0.0
    %109 = vmatpush1.msra.mxu0 0.0
    %110 = vmatprep.subr.mxu0 0.0
    %111 = vmatpush1.msra.mxu0 0.0
    %112 = vmatprep.subr.mxu0 0.0
    %113 = vmatpush1.msra.mxu0 0.0
    %114 = vmatprep.subr.mxu0 0.0
    %115 = vmatpush1.msra.mxu0 0.0
    %116 = vmatprep.subr.mxu0 0.0
    %117 = vmatpush1.msra.mxu0 0.0
    %118 = vmatprep.subr.mxu0 0.0
    %119 = vmatpush1.msra.mxu0 0.0
    %120 = vmatprep.subr.mxu0 0.0
    %121 = vmatpush1.msra.mxu0 0.0
    %122 = vmatprep.mubr.f32.mxu0 0.0
    %123 = vmatmul.mubr.f32.gmra.mrb[0].mxu0 %v52
    %v124 = vpop.f32.mrb[0].mxu0
    %v125 = vadd.f32 %v48, %v124
    %v126 = vpop.f32.mrb[0].mxu0
    %127 = vdwg.mxu0
    %v128 = vmax.f32 %v125, 0.0
    %s129 = scalar_lea.vmem [#allocation4], 16
    %v130 = vld [vmem:[%s129] sm:$0xff]
    %v131 = vld [vmem:[%s129 + $0x8] sm:$0xff]
    %s132 = scalar_lea.vmem %s2, 1
    %v133 = vld [vmem:[%s132] sm:$0x1]
    %v135 = vlaneseq
    %v136 = vshrl.u32 %v135, 7
    %v137 = vsub.s32 0, %v136
    %v138 = vrot.slane %v133, %v137
    %vm140 = vcmask 130048
    %v142 = vsel %vm140, %v128, 0
    %144 = vmatprep.subr.mxu0 0.0
    %145 = vmatpush1.msra.mxu0 %v130
    %146 = vmatprep.subr.mxu0 0.0
    %147 = vmatpush1.msra.mxu0 %v131
    %148 = vmatprep.subr.mxu0 0.0
    %149 = vmatpush1.msra.mxu0 0.0
    %150 = vmatprep.subr.mxu0 0.0
    %151 = vmatpush1.msra.mxu0 0.0
    %152 = vmatprep.subr.mxu0 0.0
    %153 = vmatpush1.msra.mxu0 0.0
    %154 = vmatprep.subr.mxu0 0.0
    %155 = vmatpush1.msra.mxu0 0.0
    %156 = vmatprep.subr.mxu0 0.0
    %157 = vmatpush1.msra.mxu0 0.0
    %158 = vmatprep.subr.mxu0 0.0
    %159 = vmatpush1.msra.mxu0 0.0
    %160 = vmatprep.subr.mxu0 0.0
    %161 = vmatpush1.msra.mxu0 0.0
    %162 = vmatprep.subr.mxu0 0.0
    %163 = vmatpush1.msra.mxu0 0.0
    %164 = vmatprep.subr.mxu0 0.0
    %165 = vmatpush1.msra.mxu0 0.0
    %166 = vmatprep.subr.mxu0 0.0
    %167 = vmatpush1.msra.mxu0 0.0
    %168 = vmatprep.subr.mxu0 0.0
    %169 = vmatpush1.msra.mxu0 0.0
    %170 = vmatprep.subr.mxu0 0.0
    %171 = vmatpush1.msra.mxu0 0.0
    %172 = vmatprep.subr.mxu0 0.0
    %173 = vmatpush1.msra.mxu0 0.0
    %174 = vmatprep.subr.mxu0 0.0
    %175 = vmatpush1.msra.mxu0 0.0
    %176 = vmatprep.subr.mxu0 0.0
    %177 = vmatpush1.msra.mxu0 0.0
    %178 = vmatprep.subr.mxu0 0.0
    %179 = vmatpush1.msra.mxu0 0.0
    %180 = vmatprep.subr.mxu0 0.0
    %181 = vmatpush1.msra.mxu0 0.0
    %182 = vmatprep.subr.mxu0 0.0
    %183 = vmatpush1.msra.mxu0 0.0
    %184 = vmatprep.subr.mxu0 0.0
    %185 = vmatpush1.msra.mxu0 0.0
    %186 = vmatprep.subr.mxu0 0.0
    %187 = vmatpush1.msra.mxu0 0.0
    %188 = vmatprep.subr.mxu0 0.0
    %189 = vmatpush1.msra.mxu0 0.0
    %190 = vmatprep.subr.mxu0 0.0
    %191 = vmatpush1.msra.mxu0 0.0
    %192 = vmatprep.subr.mxu0 0.0
    %193 = vmatpush1.msra.mxu0 0.0
    %194 = vmatprep.subr.mxu0 0.0
    %195 = vmatpush1.msra.mxu0 0.0
    %196 = vmatprep.subr.mxu0 0.0
    %197 = vmatpush1.msra.mxu0 0.0
    %198 = vmatprep.subr.mxu0 0.0
    %199 = vmatpush1.msra.mxu0 0.0
    %200 = vmatprep.subr.mxu0 0.0
    %201 = vmatpush1.msra.mxu0 0.0
    %202 = vmatprep.subr.mxu0 0.0
    %203 = vmatpush1.msra.mxu0 0.0
    %204 = vmatprep.subr.mxu0 0.0
    %205 = vmatpush1.msra.mxu0 0.0
    %206 = vmatprep.subr.mxu0 0.0
    %207 = vmatpush1.msra.mxu0 0.0
    %208 = vmatprep.mubr.f32.mxu0 0.0
    %209 = vmatmul.mubr.f32.gmra.mrb[0].mxu0 %v142
    %v210 = vpop.f32.mrb[0].mxu0
    %v211 = vadd.f32 %v138, %v210
    %v212 = vpop.f32.mrb[0].mxu0
    %213 = vdwg.mxu0
    %v214 = vmax.f32 %v211, 0.0
    %s215 = scalar_lea.vmem [#allocation4], 32
    %v216 = vld [vmem:[%s215] sm:$0xff]
    %v217 = vld [vmem:[%s215 + $0x8] sm:$0xff]
    %s218 = scalar_lea.vmem %s2, 2
    %v219 = vld [vmem:[%s218] sm:$0x1]
    %v221 = vlaneseq
    %v222 = vshrl.u32 %v221, 7
    %v223 = vsub.s32 0, %v222
    %v224 = vrot.slane %v219, %v223
    %v227 = vsel %vm140, %v214, 0
    %229 = vmatprep.subr.mxu0 0.0
    %230 = vmatpush1.msra.mxu0 %v216
    %231 = vmatprep.subr.mxu0 0.0
    %232 = vmatpush1.msra.mxu0 %v217
    %233 = vmatprep.subr.mxu0 0.0
    %234 = vmatpush1.msra.mxu0 0.0
    %235 = vmatprep.subr.mxu0 0.0
    %236 = vmatpush1.msra.mxu0 0.0
    %237 = vmatprep.subr.mxu0 0.0
    %238 = vmatpush1.msra.mxu0 0.0
    %239 = vmatprep.subr.mxu0 0.0
    %240 = vmatpush1.msra.mxu0 0.0
    %241 = vmatprep.subr.mxu0 0.0
    %242 = vmatpush1.msra.mxu0 0.0
    %243 = vmatprep.subr.mxu0 0.0
    %244 = vmatpush1.msra.mxu0 0.0
    %245 = vmatprep.subr.mxu0 0.0
    %246 = vmatpush1.msra.mxu0 0.0
    %247 = vmatprep.subr.mxu0 0.0
    %248 = vmatpush1.msra.mxu0 0.0
    %249 = vmatprep.subr.mxu0 0.0
    %250 = vmatpush1.msra.mxu0 0.0
    %251 = vmatprep.subr.mxu0 0.0
    %252 = vmatpush1.msra.mxu0 0.0
    %253 = vmatprep.subr.mxu0 0.0
    %254 = vmatpush1.msra.mxu0 0.0
    %255 = vmatprep.subr.mxu0 0.0
    %256 = vmatpush1.msra.mxu0 0.0
    %257 = vmatprep.subr.mxu0 0.0
    %258 = vmatpush1.msra.mxu0 0.0
    %259 = vmatprep.subr.mxu0 0.0
    %260 = vmatpush1.msra.mxu0 0.0
    %261 = vmatprep.subr.mxu0 0.0
    %262 = vmatpush1.msra.mxu0 0.0
    %263 = vmatprep.subr.mxu0 0.0
    %264 = vmatpush1.msra.mxu0 0.0
    %265 = vmatprep.subr.mxu0 0.0
    %266 = vmatpush1.msra.mxu0 0.0
    %267 = vmatprep.subr.mxu0 0.0
    %268 = vmatpush1.msra.mxu0 0.0
    %269 = vmatprep.subr.mxu0 0.0
    %270 = vmatpush1.msra.mxu0 0.0
    %271 = vmatprep.subr.mxu0 0.0
    %272 = vmatpush1.msra.mxu0 0.0
    %273 = vmatprep.subr.mxu0 0.0
    %274 = vmatpush1.msra.mxu0 0.0
    %275 = vmatprep.subr.mxu0 0.0
    %276 = vmatpush1.msra.mxu0 0.0
    %277 = vmatprep.subr.mxu0 0.0
    %278 = vmatpush1.msra.mxu0 0.0
    %279 = vmatprep.subr.mxu0 0.0
    %280 = vmatpush1.msra.mxu0 0.0
    %281 = vmatprep.subr.mxu0 0.0
    %282 = vmatpush1.msra.mxu0 0.0
    %283 = vmatprep.subr.mxu0 0.0
    %284 = vmatpush1.msra.mxu0 0.0
    %285 = vmatprep.subr.mxu0 0.0
    %286 = vmatpush1.msra.mxu0 0.0
    %287 = vmatprep.subr.mxu0 0.0
    %288 = vmatpush1.msra.mxu0 0.0
    %289 = vmatprep.subr.mxu0 0.0
    %290 = vmatpush1.msra.mxu0 0.0
    %291 = vmatprep.subr.mxu0 0.0
    %292 = vmatpush1.msra.mxu0 0.0
    %293 = vmatprep.mubr.f32.mxu0 0.0
    %294 = vmatmul.mubr.f32.gmra.mrb[0].mxu0 %v227
    %v295 = vpop.f32.mrb[0].mxu0
    %v296 = vadd.f32 %v224, %v295
    %v297 = vpop.f32.mrb[0].mxu0
    %298 = vdwg.mxu0
    %vm299 = vcmask 7168
    %300 = vst.msk [vmem:[%s3] sm:$0xff] %vm299, %v296
    // Predicated region
    $region22: #{tpu_custom_call.1} parent=1 // pred_check
      _
    $region23: #{tpu_custom_call.1} parent=1 // pred_check_branch
      %302 = sbr.rel (0) target = $region25
    $region24: #{tpu_custom_call.1} parent=1 // pred_region
      _
    $region25: #{tpu_custom_call.1} parent=1 // pred_fallthru
      _
    // Predicated region
    $region26: #{tpu_custom_call.1} parent=1 // pred_check
      _
    $region27: #{tpu_custom_call.1} parent=1 // pred_check_branch
      %304 = sbr.rel (0) target = $region29
    $region28: #{tpu_custom_call.1} parent=1 // pred_region
      _
    $region29: #{tpu_custom_call.1} parent=1 // pred_fallthru
      _
    %305 = vsyncpa [#allocation3], 1
    %306 = vsyncpa [#allocation5], 1

</llo_original>
